<compile_context>
chip_gen: v6e
topology: v6e:2x2x1
jax: 0.10.0
libtpu: 0.0.40
codegen_flags: <defaults>
</compile_context>

<pallas_src>
import functools

import jax
import jax.numpy as jnp
import numpy as np
from jax.experimental import pallas as pl
from jax.experimental.pallas import tpu as pltpu


def _smooth_masked_kernel(alpha_ref, keep_ref, x_ref, e_ref, w_ref, b_ref,
                          r_ref, out_ref, *, avg_logits):
    """Single grid step: all S samples folded into the row (M) dimension."""
    # alpha.view(bsz,1,mask_dim) * keep_mask for every sample at once. (M, G)
    # Cast to bf16 only as an MXU operand (keep is 0/1, exact in bf16).
    a_eff = (alpha_ref[...] * keep_ref[...]).astype(jnp.bfloat16)

    # F.interpolate(alpha, scale_factor, mode='nearest') flattened to pixel
    # resolution: exact 0/1 expansion matmul (one 1 per column of E). (M, P)
    mask = jnp.dot(a_eff, e_ref[...], preferred_element_type=jnp.float32)

    # Masked image: elementwise stays f32 (v5e has no bf16 VPU); only the
    # MXU operand is cast down.                                       (M, P)
    masked = (x_ref[...].astype(jnp.float32) * mask).astype(jnp.bfloat16)

    # Base classifier Linear(P, KP), lane-dense padded KP, f32 accum. (M, KP)
    logits = jnp.dot(masked, w_ref[...],
                     preferred_element_type=jnp.float32) + b_ref[...]

    if avg_logits:
        votes = logits
    else:
        # F.one_hot(y.argmax(-1)) with first-max tie-breaking (torch argmax).
        # Padded lanes carry bias=-1e30 so they can never be the row max.
        kp = logits.shape[-1]
        lane = jax.lax.broadcasted_iota(jnp.int32, logits.shape, 1)
        row_max = jnp.max(logits, axis=-1, keepdims=True)
        is_max = logits == row_max
        first_idx = jnp.min(jnp.where(is_max, lane, kp),
                            axis=-1, keepdims=True)
        votes = (lane == first_idx).astype(jnp.float32)

    # Mean over the S samples folded into the rows, as a tiny reduction
    # matmul: R[b, s*B + b] = 1/S.                                   (B, KP)
    out_ref[...] = jnp.dot(r_ref[...], votes,
                           preferred_element_type=jnp.float32)


def smooth_masked_classify(x, alpha, keep, e_mat, w, bias, *,
                           avg_logits=False):
    """
    x     : (B, C, H, W) float32
    alpha : (B, G)       float32   (G = gH*gW mask cells)
    keep  : (S, B, G)    float32   (0/1 keep mask per MC sample)
    e_mat : (G, P)       float32   (nearest-upsample expansion, P = C*H*W)
    w     : (P, K)       float32   (synthetic base classifier weight)
    bias  : (K,)         float32
    returns (B, K) float32
    """
    B, C, H, W = x.shape
    S = keep.shape[0]
    G, P = e_mat.shape
    K = w.shape[1]
    assert C * H * W == P

    if avg_logits:
        # mean_s[(x*up(alpha*keep_s)) @ W + b] == (x*up(alpha*mean_s keep_s)) @ W + b
        keep = keep.mean(axis=0, keepdims=True)
        S = 1

    M = S * B                                   # samples folded into M dim
    KP = max(128, ((K + 127) // 128) * 128)     # lane-dense padded class dim

    # ---- glue: layout plumbing only (mirrors PyTorch .view/.repeat) --------
    x_rep = jnp.tile(x.reshape(B, P), (S, 1)).astype(jnp.bfloat16)    # (M, P)
    alpha_rep = jnp.tile(alpha, (S, 1))                               # (M, G)
    keep_flat = keep.reshape(M, G)                                    # (M, G)
    e_b16 = e_mat.astype(jnp.bfloat16)                                # exact
    # Classifier padded to KP lanes; padded bias = -1e30 so a padded lane can
    # never win the argmax (columns sliced off below either way).
    w_pad = jnp.zeros((P, KP), jnp.bfloat16).at[:, :K].set(
        w.astype(jnp.bfloat16))
    b_pad = jnp.full((1, KP), -1e30, jnp.float32).at[0, :K].set(bias)
    # per-sample -> per-batch mean-reduction matrix  R[b, s*B+b] = 1/S
    r_mat = (jnp.arange(B)[:, None] == (jnp.arange(M)[None, :] % B)
             ).astype(jnp.float32) / S                                # (B, M)

    kernel = functools.partial(_smooth_masked_kernel, avg_logits=avg_logits)

    out = pl.pallas_call(
        kernel,
        out_shape=jax.ShapeDtypeStruct((B, KP), jnp.float32),
        grid=(1,),
        in_specs=[
            pl.BlockSpec((M, G), lambda i: (0, 0)),    # alpha (replicated)
            pl.BlockSpec((M, G), lambda i: (0, 0)),    # keep  (all samples)
            pl.BlockSpec((M, P), lambda i: (0, 0)),    # x     (replicated)
            pl.BlockSpec((G, P), lambda i: (0, 0)),    # expansion E
            pl.BlockSpec((P, KP), lambda i: (0, 0)),   # classifier W (padded)
            pl.BlockSpec((1, KP), lambda i: (0, 0)),   # classifier b (padded)
            pl.BlockSpec((B, M), lambda i: (0, 0)),    # sample-mean reducer R
        ],
        out_specs=pl.BlockSpec((B, KP), lambda i: (0, 0)),
        compiler_params=pltpu.CompilerParams(
            dimension_semantics=("arbitrary",)),
    )(alpha_rep, keep_flat, x_rep, e_b16, w_pad, b_pad, r_mat)

    return out[:, :K]


def build_expansion_matrix(C, H, W, gH, gW):
    """E[g, p] = 1 iff flattened pixel p (any channel) lies in grid cell g."""
    sH, sW = H // gH, W // gW
    h = jnp.arange(H)
    w = jnp.arange(W)
    cell = (h[:, None] // sH) * gW + (w[None, :] // sW)              # (H, W)
    cell_flat = jnp.broadcast_to(cell[None], (C, H, W)).reshape(-1)  # (P,)
    g = jnp.arange(gH * gW)
    return (g[:, None] == cell_flat[None, :]).astype(jnp.float32)    # (G, P)


def reference(x, alpha, keep, w, bias, gH, gW, avg_logits=False,
              quantize=True):
    """Pure-JAX mirror of the PyTorch forward.

    With quantize=True the MXU operands (alpha*keep, masked image, classifier
    weight) are rounded to bf16 to mirror the kernel's bf16 MXU / f32-accum
    path so the argmax/one-hot comparison is apples-to-apples.
    """
    B, C, H, W = x.shape
    S = keep.shape[0]
    sH, sW = H // gH, W // gW
    P = C * H * W
    K = w.shape[1]
    a_eff = alpha[None] * keep                                # (S, B, G)
    if quantize:
        a_eff = a_eff.astype(jnp.bfloat16).astype(jnp.float32)
        xq = x.astype(jnp.bfloat16).astype(jnp.float32)
        wq = w.astype(jnp.bfloat16).astype(jnp.float32)
    else:
        xq, wq = x, w
    a_grid = a_eff.reshape(S, B, gH, gW)
    a_up = jnp.repeat(jnp.repeat(a_grid, sH, axis=2), sW, axis=3)   # nearest
    masked = (xq[None] * a_up[:, :, None]).reshape(S, B, P)   # (S, B, P)
    if quantize:
        masked = masked.astype(jnp.bfloat16).astype(jnp.float32)
    logits = masked @ wq + bias[None, None]                   # (S, B, K)
    if avg_logits:
        return logits.mean(axis=0)
    oh = jax.nn.one_hot(jnp.argmax(logits, axis=-1), K)
    return oh.mean(axis=0)


if __name__ == "__main__":
    # Small shapes consistent with the module:
    B, C, H, W = 2, 4, 16, 16          # image_size=(16,16)
    gH, gW = 4, 4                      # grid_size=(4,4)  -> scale_factor=(4,4)
    S = 8                              # num_samples
    K = 10                             # num_classes of synthetic classifier
    lambda_ = 0.5
    G = gH * gW
    P = C * H * W

    key = jax.random.PRNGKey(0)
    kx, ka, km, kw, kb = jax.random.split(key, 5)

    x = jax.random.normal(kx, (B, C, H, W), dtype=jnp.float32)
    alpha = jax.random.uniform(ka, (B, G), dtype=jnp.float32)
    # keep_mask = torch.rand(bsz, num_samples, mask_dim) <= lambda_
    # TODO(synk): torch.rand RNG stream is not reproducible in JAX; uses jax.random.
    keep_bnm = (jax.random.uniform(km, (B, S, G)) <= lambda_).astype(jnp.float32)
    keep = jnp.transpose(keep_bnm, (1, 0, 2))                 # (S, B, G)

    # Deterministic synthetic base classifier: flatten(NCHW) -> Linear(P, K).
    w = jax.random.normal(kw, (P, K), dtype=jnp.float32) * 0.02
    bias = jax.random.normal(kb, (K,), dtype=jnp.float32) * 0.1

    e_mat = build_expansion_matrix(C, H, W, gH, gW)

    # --- one-hot voting path (module default, avg_logits=False) ---
    out_vote = smooth_masked_classify(x, alpha, keep, e_mat, w, bias,
                                      avg_logits=False)
    out_vote = jax.block_until_ready(out_vote)
    ref_vote = reference(x, alpha, keep, w, bias, gH, gW,
                         avg_logits=False, quantize=True)
    assert out_vote.shape == (B, K)
    assert np.allclose(np.asarray(out_vote), np.asarray(ref_vote),
                       atol=1e-3), "one-hot vote mismatch vs reference"

    # --- averaged-logits path (avg_logits=True, collapsed algebraically) ---
    out_avg = smooth_masked_classify(x, alpha, keep, e_mat, w, bias,
                                     avg_logits=True)
    out_avg = jax.block_until_ready(out_avg)
    ref_avg = reference(x, alpha, keep, w, bias, gH, gW,
                        avg_logits=True, quantize=False)
    assert out_avg.shape == (B, K)
    assert np.allclose(np.asarray(out_avg), np.asarray(ref_avg),
                       atol=2e-2), "avg-logits mismatch vs reference"

    print("KERNEL_OK")
</pallas_src>

<mosaic_0001>
module attributes {stable_mosaic.version = 11 : i64} {
  func.func @_smooth_masked_kernel(%arg0: i32, %arg1: memref<16x16xf32, #tpu.memory_space<vmem>>, %arg2: memref<16x16xf32, #tpu.memory_space<vmem>>, %arg3: memref<16x1024xbf16, #tpu.memory_space<vmem>>, %arg4: memref<16x1024xbf16, #tpu.memory_space<vmem>>, %arg5: memref<1024x128xbf16, #tpu.memory_space<vmem>>, %arg6: memref<1x128xf32, #tpu.memory_space<vmem>>, %arg7: memref<2x16xf32, #tpu.memory_space<vmem>>, %arg8: memref<2x128xf32, #tpu.memory_space<vmem>>) attributes {dimension_semantics = [#tpu.dimension_semantics<arbitrary>], iteration_bounds = array<i64: 1>, scalar_prefetch = 0 : i64, scratch_operands = 0 : i64, tpu.core_type = #tpu.core_type<tc>, window_params = [{pipeline_mode = #tpu.pipeline_mode<synchronous>, transform_indices = @transform_0, window_bounds = array<i64: 16, 16>}, {pipeline_mode = #tpu.pipeline_mode<synchronous>, transform_indices = @transform_1, window_bounds = array<i64: 16, 16>}, {pipeline_mode = #tpu.pipeline_mode<synchronous>, transform_indices = @transform_2, window_bounds = array<i64: 16, 1024>}, {pipeline_mode = #tpu.pipeline_mode<synchronous>, transform_indices = @transform_3, window_bounds = array<i64: 16, 1024>}, {pipeline_mode = #tpu.pipeline_mode<synchronous>, transform_indices = @transform_4, window_bounds = array<i64: 1024, 128>}, {pipeline_mode = #tpu.pipeline_mode<synchronous>, transform_indices = @transform_5, window_bounds = array<i64: 1, 128>}, {pipeline_mode = #tpu.pipeline_mode<synchronous>, transform_indices = @transform_6, window_bounds = array<i64: 2, 16>}, {pipeline_mode = #tpu.pipeline_mode<synchronous>, transform_indices = @transform_7, window_bounds = array<i64: 2, 128>}]} {
    %c0 = arith.constant 0 : index
    %c0_0 = arith.constant 0 : index
    %0 = vector.load %arg1[%c0, %c0_0] : memref<16x16xf32, #tpu.memory_space<vmem>>, vector<16x16xf32>
    %c0_1 = arith.constant 0 : index
    %c0_2 = arith.constant 0 : index
    %1 = vector.load %arg2[%c0_1, %c0_2] : memref<16x16xf32, #tpu.memory_space<vmem>>, vector<16x16xf32>
    %2 = arith.mulf %0, %1 : vector<16x16xf32>
    %3 = arith.truncf %2 : vector<16x16xf32> to vector<16x16xbf16>
    %c0_3 = arith.constant 0 : index
    %c0_4 = arith.constant 0 : index
    %4 = vector.load %arg4[%c0_3, %c0_4] : memref<16x1024xbf16, #tpu.memory_space<vmem>>, vector<16x1024xbf16>
    %cst = arith.constant dense<0.000000e+00> : vector<16x1024xf32>
    %5 = tpu.matmul %3, %4, %cst {dimension_numbers = #tpu.dot_dimension_numbers<[1], [0], [0], [1], [0, 0, 1, 1], [], []>} : vector<16x16xbf16>, vector<16x1024xbf16>, vector<16x1024xf32> -> vector<16x1024xf32>
    %c0_5 = arith.constant 0 : index
    %c0_6 = arith.constant 0 : index
    %6 = vector.load %arg3[%c0_5, %c0_6] : memref<16x1024xbf16, #tpu.memory_space<vmem>>, vector<16x1024xbf16>
    %7 = arith.extf %6 : vector<16x1024xbf16> to vector<16x1024xf32>
    %8 = arith.mulf %7, %5 : vector<16x1024xf32>
    %9 = arith.truncf %8 : vector<16x1024xf32> to vector<16x1024xbf16>
    %c0_7 = arith.constant 0 : index
    %c0_8 = arith.constant 0 : index
    %10 = vector.load %arg5[%c0_7, %c0_8] : memref<1024x128xbf16, #tpu.memory_space<vmem>>, vector<1024x128xbf16>
    %cst_9 = arith.constant dense<0.000000e+00> : vector<16x128xf32>
    %11 = tpu.matmul %9, %10, %cst_9 {dimension_numbers = #tpu.dot_dimension_numbers<[1], [0], [0], [1], [0, 0, 1, 1], [], []>} : vector<16x1024xbf16>, vector<1024x128xbf16>, vector<16x128xf32> -> vector<16x128xf32>
    %c0_10 = arith.constant 0 : index
    %c0_11 = arith.constant 0 : index
    %12 = vector.load %arg6[%c0_10, %c0_11] : memref<1x128xf32, #tpu.memory_space<vmem>>, vector<1x128xf32>
    %13 = vector.broadcast %12 : vector<1x128xf32> to vector<16x128xf32>
    %14 = arith.addf %11, %13 : vector<16x128xf32>
    %15 = tpu.iota {dimensions = array<i32: 1>} : vector<16x128xi32>
    %cst_12 = arith.constant dense<0xFF800000> : vector<16xf32>
    %16 = vector.multi_reduction <maximumf>, %14, %cst_12 [1] : vector<16x128xf32> to vector<16xf32>
    %17 = vector.shape_cast %16 : vector<16xf32> to vector<16x1xf32>
    %18 = vector.broadcast %17 : vector<16x1xf32> to vector<16x128xf32>
    %19 = arith.cmpf oeq, %14, %18 : vector<16x128xf32>
    %c128_i32 = arith.constant 128 : i32
    %20 = vector.broadcast %c128_i32 : i32 to vector<16x128xi32>
    %21 = arith.select %19, %15, %20 : vector<16x128xi1>, vector<16x128xi32>
    %cst_13 = arith.constant dense<2147483647> : vector<16xi32>
    %22 = vector.multi_reduction <minsi>, %21, %cst_13 [1] : vector<16x128xi32> to vector<16xi32>
    %23 = vector.shape_cast %22 : vector<16xi32> to vector<16x1xi32>
    %24 = vector.broadcast %23 : vector<16x1xi32> to vector<16x128xi32>
    %25 = arith.cmpi eq, %15, %24 : vector<16x128xi32>
    %26 = arith.extui %25 : vector<16x128xi1> to vector<16x128xi32>
    %27 = arith.sitofp %26 : vector<16x128xi32> to vector<16x128xf32>
    %c0_14 = arith.constant 0 : index
    %c0_15 = arith.constant 0 : index
    %28 = vector.load %arg7[%c0_14, %c0_15] : memref<2x16xf32, #tpu.memory_space<vmem>>, vector<2x16xf32>
    %cst_16 = arith.constant dense<0.000000e+00> : vector<2x128xf32>
    %29 = tpu.matmul %28, %27, %cst_16 {dimension_numbers = #tpu.dot_dimension_numbers<[1], [0], [0], [1], [0, 0, 1, 1], [], []>} : vector<2x16xf32>, vector<16x128xf32>, vector<2x128xf32> -> vector<2x128xf32>
    %c0_17 = arith.constant 0 : index
    %c0_18 = arith.constant 0 : index
    %30 = vector.load %arg8[%c0_17, %c0_18] : memref<2x128xf32, #tpu.memory_space<vmem>>, vector<2x128xf32>
    tpu.vector_store %arg8[%c0_17, %c0_18], %29 {strides = array<i32>} : memref<2x128xf32, #tpu.memory_space<vmem>>, vector<2x128xf32>,
    return
  }
  func.func @transform_0(%arg0: i32) -> (i32, i32) {
    %c0_i32 = arith.constant 0 : i32
    %c0_i32_0 = arith.constant 0 : i32
    %c0_i32_1 = arith.constant 0 : i32
    return %c0_i32, %c0_i32_0 : i32, i32
  }
  func.func @transform_1(%arg0: i32) -> (i32, i32) {
    %c0_i32 = arith.constant 0 : i32
    %c0_i32_0 = arith.constant 0 : i32
    %c0_i32_1 = arith.constant 0 : i32
    return %c0_i32, %c0_i32_0 : i32, i32
  }
  func.func @transform_2(%arg0: i32) -> (i32, i32) {
    %c0_i32 = arith.constant 0 : i32
    %c0_i32_0 = arith.constant 0 : i32
    %c0_i32_1 = arith.constant 0 : i32
    return %c0_i32, %c0_i32_0 : i32, i32
  }
  func.func @transform_3(%arg0: i32) -> (i32, i32) {
    %c0_i32 = arith.constant 0 : i32
    %c0_i32_0 = arith.constant 0 : i32
    %c0_i32_1 = arith.constant 0 : i32
    return %c0_i32, %c0_i32_0 : i32, i32
  }
  func.func @transform_4(%arg0: i32) -> (i32, i32) {
    %c0_i32 = arith.constant 0 : i32
    %c0_i32_0 = arith.constant 0 : i32
    %c0_i32_1 = arith.constant 0 : i32
    return %c0_i32, %c0_i32_0 : i32, i32
  }
  func.func @transform_5(%arg0: i32) -> (i32, i32) {
    %c0_i32 = arith.constant 0 : i32
    %c0_i32_0 = arith.constant 0 : i32
    %c0_i32_1 = arith.constant 0 : i32
    return %c0_i32, %c0_i32_0 : i32, i32
  }
  func.func @transform_6(%arg0: i32) -> (i32, i32) {
    %c0_i32 = arith.constant 0 : i32
    %c0_i32_0 = arith.constant 0 : i32
    %c0_i32_1 = arith.constant 0 : i32
    return %c0_i32, %c0_i32_0 : i32, i32
  }
  func.func @transform_7(%arg0: i32) -> (i32, i32) {
    %c0_i32 = arith.constant 0 : i32
    %c0_i32_0 = arith.constant 0 : i32
    %c0_i32_1 = arith.constant 0 : i32
    return %c0_i32, %c0_i32_0 : i32, i32
  }
}

</mosaic_0001>

<llo_original>
// kernel: tpu_custom_call.1
$region0: #{tpu_custom_call.1}
  #allocation0 [shape = 'u32[]', space=smem, size = 0x4, offset = 0x4, fixed_abs, tag = 'smem constant byte address 0x4 - core index']
  #allocation1 [shape = 'u32[144,128]{1,0:T(1,128)}', space=vmem, size = 0x12000, scoped, tag = 'internal scratch']
  %s0 = inlined_call_operand.hbm [shape: f32[16,16], index: 0, kind: input, shape index: {}]
  %s1 = inlined_call_operand.hbm [shape: f32[16,16], index: 1, kind: input, shape index: {}]
  %s2 = inlined_call_operand.hbm [shape: bf16[16,1024], index: 2, kind: input, shape index: {}]
  %s3 = inlined_call_operand.hbm [shape: bf16[16,1024], index: 3, kind: input, shape index: {}]
  %s4 = inlined_call_operand.hbm [shape: bf16[1024,128], index: 4, kind: input, shape index: {}]
  %s5 = inlined_call_operand.vmem [shape: f32[1,128], index: 5, kind: input, shape index: {}]
  %s6 = inlined_call_operand.vmem [shape: f32[2,16], index: 6, kind: input, shape index: {}]
  %s7 = inlined_call_operand.hbm [shape: f32[2,128], index: 7, kind: output, shape index: {}]
  %s8 = sld [smem:[#allocation0]]
  $region58: #{tpu_custom_call.1} parent=0
    _
  %s10 = ssub.s32 1, %s8
  %s11 = scalar_select 0, %s10, %s8
  $region1: #{tpu_custom_call.1} parent=0
    #allocation2 [shape = 'u8[8192]{0}', space=vmem, size = 0x2000, scoped, tag = 'input window, operand 0, single buffered']
    #allocation3 [shape = 's32[1]{0}', space=sflag, size = 0x4, scoped, tag = 'scoped memory for tpu_custom_call.1']
    #allocation4 [shape = 's32[1]{0}', space=sflag, size = 0x4, scoped, tag = 'scoped memory for tpu_custom_call.1']
    #allocation5 [shape = 'u8[8192]{0}', space=vmem, size = 0x2000, scoped, tag = 'input window, operand 1, single buffered']
    #allocation6 [shape = 's32[1]{0}', space=sflag, size = 0x4, scoped, tag = 'scoped memory for tpu_custom_call.1']
    #allocation7 [shape = 'u8[32768]{0}', space=vmem, size = 0x8000, scoped, tag = 'input window, operand 2, single buffered']
    #allocation8 [shape = 'u8[32768]{0}', space=vmem, size = 0x8000, scoped, tag = 'input window, operand 3, single buffered']
    #allocation9 [shape = 's32[1]{0}', space=sflag, size = 0x4, scoped, tag = 'scoped memory for tpu_custom_call.1']
    #allocation10 [shape = 'u8[262144]{0}', space=vmem, size = 0x40000, scoped, tag = 'input window, operand 4, single buffered']
    #allocation11 [shape = 'u8[1024]{0}', space=vmem, size = 0x400, scoped, tag = 'output window, operand 0, single buffered']
    %12 = vsyncpa [#allocation3], 0
    %13 = vsyncpa [#allocation6], 0
    %14 = vsyncpa [#allocation9], 0
    %15 = vsyncpa [#allocation4], 0
    // Predicated region
    $region2: #{tpu_custom_call.1} parent=1 // pred_check
      _
    $region3: #{tpu_custom_call.1} parent=1 // pred_check_branch
      %17 = sbr.rel (0) target = $region5
    $region4: #{tpu_custom_call.1} parent=1 // pred_region
      %s19 = ssub.s32 256, 256
      %20 = vsyncadd [#allocation3], %s19
      %s21 = sshll.u32 [#allocation2], 4
      %s22 = int_to_ptr.vmem [resolvable:$true] %s21
      %27 = dma.hbm_to_vmem [thread:$0]  %s0, 256, %s22, [#allocation3], 128, 128, 8
    $region5: #{tpu_custom_call.1} parent=1 // pred_fallthru
      _
    // Predicated region
    $region6: #{tpu_custom_call.1} parent=1 // pred_check
      _
    $region7: #{tpu_custom_call.1} parent=1 // pred_check_branch
      %29 = sbr.rel (0) target = $region9
    $region8: #{tpu_custom_call.1} parent=1 // pred_region
      %s31 = ssub.s32 256, 256
      %32 = vsyncadd [#allocation6], %s31
      %s33 = sshll.u32 [#allocation5], 4
      %s34 = int_to_ptr.vmem [resolvable:$true] %s33
      %39 = dma.hbm_to_vmem [thread:$0]  %s1, 256, %s34, [#allocation6], 128, 128, 8
    $region9: #{tpu_custom_call.1} parent=1 // pred_fallthru
      _
    // Predicated region
    $region10: #{tpu_custom_call.1} parent=1 // pred_check
      _
    $region11: #{tpu_custom_call.1} parent=1 // pred_check_branch
      %41 = sbr.rel (0) target = $region13
    $region12: #{tpu_custom_call.1} parent=1 // pred_region
      %s43 = ssub.s32 1024, 1024
      %44 = vsyncadd [#allocation6], %s43
      %s45 = sshll.u32 [#allocation7], 4
      %s46 = int_to_ptr.vmem [resolvable:$true] %s45
      %51 = dma.hbm_to_vmem [thread:$0]  %s2, 1024, %s46, [#allocation6], 512, 512, 32
    $region13: #{tpu_custom_call.1} parent=1 // pred_fallthru
      _
    // Predicated region
    $region14: #{tpu_custom_call.1} parent=1 // pred_check
      _
    $region15: #{tpu_custom_call.1} parent=1 // pred_check_branch
      %53 = sbr.rel (0) target = $region17
    $region16: #{tpu_custom_call.1} parent=1 // pred_region
      %s55 = ssub.s32 1024, 1024
      %56 = vsyncadd [#allocation9], %s55
      %s57 = sshll.u32 [#allocation8], 4
      %s58 = int_to_ptr.vmem [resolvable:$true] %s57
      %63 = dma.hbm_to_vmem [thread:$0]  %s3, 1024, %s58, [#allocation9], 512, 512, 32
    $region17: #{tpu_custom_call.1} parent=1 // pred_fallthru
      _
    // Predicated region
    $region18: #{tpu_custom_call.1} parent=1 // pred_check
      _
    $region19: #{tpu_custom_call.1} parent=1 // pred_check_branch
      %65 = sbr.rel (0) target = $region21
    $region20: #{tpu_custom_call.1} parent=1 // pred_region
      %s67 = ssub.s32 8192, 8192
      %68 = vsyncadd [#allocation9], %s67
      %s69 = sshll.u32 [#allocation10], 4
      %s70 = int_to_ptr.vmem [resolvable:$true] %s69
      %75 = dma.hbm_to_vmem [thread:$0]  %s4, 8192, %s70, [#allocation9], 64, 64, 4
    $region21: #{tpu_custom_call.1} parent=1 // pred_fallthru
      _
    // Predicated region
    $region22: #{tpu_custom_call.1} parent=1 // pred_check
      _
    $region23: #{tpu_custom_call.1} parent=1 // pred_check_branch
      %77 = sbr.rel (0) target = $region25
    $region24: #{tpu_custom_call.1} parent=1 // pred_region
      _
    $region25: #{tpu_custom_call.1} parent=1 // pred_fallthru
      _
    // Predicated region
    $region26: #{tpu_custom_call.1} parent=1 // pred_check
      _
    $region27: #{tpu_custom_call.1} parent=1 // pred_check_branch
      %79 = sbr.rel (0) target = $region29
    $region28: #{tpu_custom_call.1} parent=1 // pred_region
      _
    $region29: #{tpu_custom_call.1} parent=1 // pred_fallthru
      _
    // Predicated region
    $region30: #{tpu_custom_call.1} parent=1 // pred_check
      _
    $region31: #{tpu_custom_call.1} parent=1 // pred_check_branch
      %81 = sbr.rel (0) target = $region33
    $region32: #{tpu_custom_call.1} parent=1 // pred_region
      %82 = dma.done [#allocation3], 256
    $region33: #{tpu_custom_call.1} parent=1 // pred_fallthru
      _
    // Predicated region
    $region34: #{tpu_custom_call.1} parent=1 // pred_check
      _
    $region35: #{tpu_custom_call.1} parent=1 // pred_check_branch
      %84 = sbr.rel (0) target = $region37
    $region36: #{tpu_custom_call.1} parent=1 // pred_region
      %85 = dma.done [#allocation6], 256
    $region37: #{tpu_custom_call.1} parent=1 // pred_fallthru
      _
    // Predicated region
    $region38: #{tpu_custom_call.1} parent=1 // pred_check
      _
    $region39: #{tpu_custom_call.1} parent=1 // pred_check_branch
      %87 = sbr.rel (0) target = $region41
    $region40: #{tpu_custom_call.1} parent=1 // pred_region
      %88 = dma.done [#allocation6], 1024
    $region41: #{tpu_custom_call.1} parent=1 // pred_fallthru
      _
    // Predicated region
    $region42: #{tpu_custom_call.1} parent=1 // pred_check
      _
    $region43: #{tpu_custom_call.1} parent=1 // pred_check_branch
      %90 = sbr.rel (0) target = $region45
    $region44: #{tpu_custom_call.1} parent=1 // pred_region
      %91 = dma.done [#allocation9], 1024
    $region45: #{tpu_custom_call.1} parent=1 // pred_fallthru
      _
    // Predicated region
    $region46: #{tpu_custom_call.1} parent=1 // pred_check
      _
    $region47: #{tpu_custom_call.1} parent=1 // pred_check_branch
      %93 = sbr.rel (0) target = $region49
    $region48: #{tpu_custom_call.1} parent=1 // pred_region
      %94 = dma.done [#allocation9], 8192
    $region49: #{tpu_custom_call.1} parent=1 // pred_fallthru
      _
    %v96 = vld [vmem:[#allocation2] sm:$0xff]
    %v97 = vld [vmem:[#allocation2 + $0x8] sm:$0xff]
    %v98 = vld [vmem:[#allocation5] sm:$0xff]
    %v99 = vld [vmem:[#allocation5 + $0x8] sm:$0xff]
    %v100 = vmul.f32 %v96, %v98
    %v101 = vmul.f32 %v97, %v99
    %v102 = vpack.c.bf16 %v101, %v100
    %v103 = vld [vmem:[#allocation8] sm:$0xff]
    %v104 = vld [vmem:[#allocation8 + $0x8] sm:$0xff]
    %v105 = vld [vmem:[#allocation8 + $0x10] sm:$0xff]
    %v106 = vld [vmem:[#allocation8 + $0x18] sm:$0xff]
    %v107 = vld [vmem:[#allocation8 + $0x20] sm:$0xff]
    %v108 = vld [vmem:[#allocation8 + $0x28] sm:$0xff]
    %v109 = vld [vmem:[#allocation8 + $0x30] sm:$0xff]
    %v110 = vld [vmem:[#allocation8 + $0x38] sm:$0xff]
    %v119 = vunpack.c.l.b16 %v103
    %v120 = vunpack.c.h.b16 %v103
    %v121 = vunpack.c.l.b16 %v104
    %v122 = vunpack.c.h.b16 %v104
    %v123 = vunpack.c.l.b16 %v105
    %v124 = vunpack.c.h.b16 %v105
    %v125 = vunpack.c.l.b16 %v106
    %v126 = vunpack.c.h.b16 %v106
    %v127 = vunpack.c.l.b16 %v107
    %v128 = vunpack.c.h.b16 %v107
    %v129 = vunpack.c.l.b16 %v108
    %v130 = vunpack.c.h.b16 %v108
    %v131 = vunpack.c.l.b16 %v109
    %v132 = vunpack.c.h.b16 %v109
    %v133 = vunpack.c.l.b16 %v110
    %v134 = vunpack.c.h.b16 %v110
    %v135 = vpack.c.b16 %v127, %v119
    %v136 = vpack.c.b16 %v128, %v120
    %v137 = vpack.c.b16 %v129, %v121
    %v138 = vpack.c.b16 %v130, %v122
    %v139 = vpack.c.b16 %v131, %v123
    %v140 = vpack.c.b16 %v132, %v124
    %v141 = vpack.c.b16 %v133, %v125
    %v142 = vpack.c.b16 %v134, %v126
    %vm151 = vcmask 130048
    %v153 = vsel %vm151, %v102, 0
    %155 = vmatprep.subr.bf16.mxu0 0
    %156 = vmatpush1.bf16.msra.mxu0 0
    %157 = vmatprep.subr.bf16.mxu0 0
    %158 = vmatpush1.bf16.msra.mxu0 0
    %159 = vmatprep.subr.bf16.mxu0 0
    %160 = vmatpush1.bf16.msra.mxu0 0
    %161 = vmatprep.subr.bf16.mxu0 0
    %162 = vmatpush1.bf16.msra.mxu0 0
    %163 = vmatprep.subr.bf16.mxu0 0
    %164 = vmatpush1.bf16.msra.mxu0 0
    %165 = vmatprep.subr.bf16.mxu0 0
    %166 = vmatpush1.bf16.msra.mxu0 0
    %167 = vmatprep.subr.bf16.mxu0 0
    %168 = vmatpush1.bf16.msra.mxu0 0
    %169 = vmatprep.subr.bf16.mxu0 %v136
    %170 = vmatpush1.bf16.msra.mxu0 %v135
    %171 = vmatprep.subr.bf16.mxu0 0
    %172 = vmatpush2.bf16.msra.mxu0 0
    %173 = vmatprep.subr.bf16.mxu0 0
    %174 = vmatpush2.bf16.msra.mxu0 0
    %175 = vmatprep.subr.bf16.mxu0 0
    %176 = vmatpush2.bf16.msra.mxu0 0
    %177 = vmatprep.subr.bf16.mxu0 0
    %178 = vmatpush2.bf16.msra.mxu0 0
    %179 = vmatprep.subr.bf16.mxu0 0
    %180 = vmatpush2.bf16.msra.mxu0 0
    %181 = vmatprep.subr.bf16.mxu0 0
    %182 = vmatpush2.bf16.msra.mxu0 0
    %183 = vmatprep.subr.bf16.mxu0 0
    %184 = vmatpush2.bf16.msra.mxu0 0
    %185 = vmatprep.subr.bf16.mxu0 0
    %186 = vmatpush2.bf16.msra.mxu0 0
    %187 = vmatprep.mubr.bf16.mxu0 0
    %188 = vmatmul.mubr.bf16.gmra.mxu0 %v153
    %v189 = vpop.f32.mrf.mxu0
    %v190 = vadd.f32 0.0, %v189
    %v191 = vpop.f32.mrf.mxu0
    %v192 = vadd.f32 0.0, %v191
    %v193 = vpop.f32.mrf.mxu0
    %v194 = vadd.f32 0.0, %v193
    %v195 = vpop.f32.mrf.mxu0
    %v196 = vadd.f32 0.0, %v195
    %197 = vdwg.mxu0
    %198 = vmatprep.subr.bf16.mxu0 0
    %199 = vmatpush1.bf16.msra.mxu0 0
    %200 = vmatprep.subr.bf16.mxu0 0
    %201 = vmatpush1.bf16.msra.mxu0 0
    %202 = vmatprep.subr.bf16.mxu0 0
    %203 = vmatpush1.bf16.msra.mxu0 0
    %204 = vmatprep.subr.bf16.mxu0 0
    %205 = vmatpush1.bf16.msra.mxu0 0
    %206 = vmatprep.subr.bf16.mxu0 0
    %207 = vmatpush1.bf16.msra.mxu0 0
    %208 = vmatprep.subr.bf16.mxu0 0
    %209 = vmatpush1.bf16.msra.mxu0 0
    %210 = vmatprep.subr.bf16.mxu0 0
    %211 = vmatpush1.bf16.msra.mxu0 0
    %212 = vmatprep.subr.bf16.mxu0 %v138
    %213 = vmatpush1.bf16.msra.mxu0 %v137
    %214 = vmatprep.subr.bf16.mxu0 0
    %215 = vmatpush2.bf16.msra.mxu0 0
    %216 = vmatprep.subr.bf16.mxu0 0
    %217 = vmatpush2.bf16.msra.mxu0 0
    %218 = vmatprep.subr.bf16.mxu0 0
    %219 = vmatpush2.bf16.msra.mxu0 0
    %220 = vmatprep.subr.bf16.mxu0 0
    %221 = vmatpush2.bf16.msra.mxu0 0
    %222 = vmatprep.subr.bf16.mxu0 0
    %223 = vmatpush2.bf16.msra.mxu0 0
    %224 = vmatprep.subr.bf16.mxu0 0
    %225 = vmatpush2.bf16.msra.mxu0 0
    %226 = vmatprep.subr.bf16.mxu0 0
    %227 = vmatpush2.bf16.msra.mxu0 0
    %228 = vmatprep.subr.bf16.mxu0 0
    %229 = vmatpush2.bf16.msra.mxu0 0
    %230 = vmatprep.mubr.bf16.mxu0 0
    %231 = vmatmul.mubr.bf16.gmra.mxu0 %v153
    %v232 = vpop.f32.mrf.mxu0
    %v233 = vadd.f32 0.0, %v232
    %v234 = vpop.f32.mrf.mxu0
    %v235 = vadd.f32 0.0, %v234
    %v236 = vpop.f32.mrf.mxu0
    %v237 = vadd.f32 0.0, %v236
    %v238 = vpop.f32.mrf.mxu0
    %v239 = vadd.f32 0.0, %v238
    %240 = vdwg.mxu0
    %241 = vmatprep.subr.bf16.mxu0 0
    %242 = vmatpush1.bf16.msra.mxu0 0
    %243 = vmatprep.subr.bf16.mxu0 0
    %244 = vmatpush1.bf16.msra.mxu0 0
    %245 = vmatprep.subr.bf16.mxu0 0
    %246 = vmatpush1.bf16.msra.mxu0 0
    %247 = vmatprep.subr.bf16.mxu0 0
    %248 = vmatpush1.bf16.msra.mxu0 0
    %249 = vmatprep.subr.bf16.mxu0 0
    %250 = vmatpush1.bf16.msra.mxu0 0
    %251 = vmatprep.subr.bf16.mxu0 0
    %252 = vmatpush1.bf16.msra.mxu0 0
    %253 = vmatprep.subr.bf16.mxu0 0
    %254 = vmatpush1.bf16.msra.mxu0 0
    %255 = vmatprep.subr.bf16.mxu0 %v140
    %256 = vmatpush1.bf16.msra.mxu0 %v139
    %257 = vmatprep.subr.bf16.mxu0 0
    %258 = vmatpush2.bf16.msra.mxu0 0
    %259 = vmatprep.subr.bf16.mxu0 0
    %260 = vmatpush2.bf16.msra.mxu0 0
    %261 = vmatprep.subr.bf16.mxu0 0
    %262 = vmatpush2.bf16.msra.mxu0 0
    %263 = vmatprep.subr.bf16.mxu0 0
    %264 = vmatpush2.bf16.msra.mxu0 0
    %265 = vmatprep.subr.bf16.mxu0 0
    %266 = vmatpush2.bf16.msra.mxu0 0
    %267 = vmatprep.subr.bf16.mxu0 0
    %268 = vmatpush2.bf16.msra.mxu0 0
    %269 = vmatprep.subr.bf16.mxu0 0
    %270 = vmatpush2.bf16.msra.mxu0 0
    %271 = vmatprep.subr.bf16.mxu0 0
    %272 = vmatpush2.bf16.msra.mxu0 0
    %273 = vmatprep.mubr.bf16.mxu0 0
    %274 = vmatmul.mubr.bf16.gmra.mxu0 %v153
    %v275 = vpop.f32.mrf.mxu0
    %v276 = vadd.f32 0.0, %v275
    %v277 = vpop.f32.mrf.mxu0
    %v278 = vadd.f32 0.0, %v277
    %v279 = vpop.f32.mrf.mxu0
    %v280 = vadd.f32 0.0, %v279
    %v281 = vpop.f32.mrf.mxu0
    %v282 = vadd.f32 0.0, %v281
    %283 = vdwg.mxu0
    %284 = vmatprep.subr.bf16.mxu0 0
    %285 = vmatpush1.bf16.msra.mxu0 0
    %286 = vmatprep.subr.bf16.mxu0 0
    %287 = vmatpush1.bf16.msra.mxu0 0
    %288 = vmatprep.subr.bf16.mxu0 0
    %289 = vmatpush1.bf16.msra.mxu0 0
    %290 = vmatprep.subr.bf16.mxu0 0
    %291 = vmatpush1.bf16.msra.mxu0 0
    %292 = vmatprep.subr.bf16.mxu0 0
    %293 = vmatpush1.bf16.msra.mxu0 0
    %294 = vmatprep.subr.bf16.mxu0 0
    %295 = vmatpush1.bf16.msra.mxu0 0
    %296 = vmatprep.subr.bf16.mxu0 0
    %297 = vmatpush1.bf16.msra.mxu0 0
    %298 = vmatprep.subr.bf16.mxu0 %v142
    %299 = vmatpush1.bf16.msra.mxu0 %v141
    %300 = vmatprep.subr.bf16.mxu0 0
    %301 = vmatpush2.bf16.msra.mxu0 0
    %302 = vmatprep.subr.bf16.mxu0 0
    %303 = vmatpush2.bf16.msra.mxu0 0
    %304 = vmatprep.subr.bf16.mxu0 0
    %305 = vmatpush2.bf16.msra.mxu0 0
    %306 = vmatprep.subr.bf16.mxu0 0
    %307 = vmatpush2.bf16.msra.mxu0 0
    %308 = vmatprep.subr.bf16.mxu0 0
    %309 = vmatpush2.bf16.msra.mxu0 0
    %310 = vmatprep.subr.bf16.mxu0 0
    %311 = vmatpush2.bf16.msra.mxu0 0
    %312 = vmatprep.subr.bf16.mxu0 0
    %313 = vmatpush2.bf16.msra.mxu0 0
    %314 = vmatprep.subr.bf16.mxu0 0
    %315 = vmatpush2.bf16.msra.mxu0 0
    %316 = vmatprep.mubr.bf16.mxu0 0
    %317 = vmatmul.mubr.bf16.gmra.mxu0 %v153
    %v318 = vpop.f32.mrf.mxu0
    %v319 = vadd.f32 0.0, %v318
    %v320 = vpop.f32.mrf.mxu0
    %v321 = vadd.f32 0.0, %v320
    %v322 = vpop.f32.mrf.mxu0
    %v323 = vadd.f32 0.0, %v322
    %v324 = vpop.f32.mrf.mxu0
    %v325 = vadd.f32 0.0, %v324
    %326 = vdwg.mxu0
    %v327 = vld [vmem:[#allocation7] sm:$0xff]
    %v328 = vld [vmem:[#allocation7 + $0x8] sm:$0xff]
    %v329 = vld [vmem:[#allocation7 + $0x10] sm:$0xff]
    %v330 = vld [vmem:[#allocation7 + $0x18] sm:$0xff]
    %v331 = vld [vmem:[#allocation7 + $0x20] sm:$0xff]
    %v332 = vld [vmem:[#allocation7 + $0x28] sm:$0xff]
    %v333 = vld [vmem:[#allocation7 + $0x30] sm:$0xff]
    %v334 = vld [vmem:[#allocation7 + $0x38] sm:$0xff]
    %v335 = vunpack.c.l.bf16 %v327
    %v336 = vunpack.c.h.bf16 %v327
    %v337 = vunpack.c.l.bf16 %v328
    %v338 = vunpack.c.h.bf16 %v328
    %v339 = vunpack.c.l.bf16 %v329
    %v340 = vunpack.c.h.bf16 %v329
    %v341 = vunpack.c.l.bf16 %v330
    %v342 = vunpack.c.h.bf16 %v330
    %v343 = vunpack.c.l.bf16 %v331
    %v344 = vunpack.c.h.bf16 %v331
    %v345 = vunpack.c.l.bf16 %v332
    %v346 = vunpack.c.h.bf16 %v332
    %v347 = vunpack.c.l.bf16 %v333
    %v348 = vunpack.c.h.bf16 %v333
    %v349 = vunpack.c.l.bf16 %v334
    %v350 = vunpack.c.h.bf16 %v334
    %v351 = vmul.f32 %v335, %v190
    %v352 = vmul.f32 %v336, %v192
    %v353 = vmul.f32 %v337, %v233
    %v354 = vmul.f32 %v338, %v235
    %v355 = vmul.f32 %v339, %v276
    %v356 = vmul.f32 %v340, %v278
    %v357 = vmul.f32 %v341, %v319
    %v358 = vmul.f32 %v342, %v321
    %v359 = vmul.f32 %v343, %v194
    %v360 = vmul.f32 %v344, %v196
    %v361 = vmul.f32 %v345, %v237
    %v362 = vmul.f32 %v346, %v239
    %v363 = vmul.f32 %v347, %v280
    %v364 = vmul.f32 %v348, %v282
    %v365 = vmul.f32 %v349, %v323
    %v366 = vmul.f32 %v350, %v325
    %v367 = vpack.c.bf16 %v359, %v351
    %v368 = vpack.c.bf16 %v360, %v352
    %v369 = vpack.c.bf16 %v361, %v353
    %v370 = vpack.c.bf16 %v362, %v354
    %v371 = vpack.c.bf16 %v363, %v355
    %v372 = vpack.c.bf16 %v364, %v356
    %v373 = vpack.c.bf16 %v365, %v357
    %v374 = vpack.c.bf16 %v366, %v358
    %v375 = vld [vmem:[#allocation10] sm:$0xf]
    %v376 = vld [vmem:[#allocation10 + $0x4] sm:$0xf]
    %v377 = vld [vmem:[#allocation10 + $0x8] sm:$0xf]
    %v378 = vld [vmem:[#allocation10 + $0xc] sm:$0xf]
    %v379 = vld [vmem:[#allocation10 + $0x10] sm:$0xf]
    %v380 = vld [vmem:[#allocation10 + $0x14] sm:$0xf]
    %v381 = vld [vmem:[#allocation10 + $0x18] sm:$0xf]
    %v382 = vld [vmem:[#allocation10 + $0x1c] sm:$0xf]
    %v383 = vld [vmem:[#allocation10 + $0x20] sm:$0xf]
    %v384 = vld [vmem:[#allocation10 + $0x24] sm:$0xf]
    %v385 = vld [vmem:[#allocation10 + $0x28] sm:$0xf]
    %v386 = vld [vmem:[#allocation10 + $0x2c] sm:$0xf]
    %v387 = vld [vmem:[#allocation10 + $0x30] sm:$0xf]
    %v388 = vld [vmem:[#allocation10 + $0x34] sm:$0xf]
    %v389 = vld [vmem:[#allocation10 + $0x38] sm:$0xf]
    %v390 = vld [vmem:[#allocation10 + $0x3c] sm:$0xf]
    %v391 = vld [vmem:[#allocation10 + $0x40] sm:$0xf]
    %v392 = vld [vmem:[#allocation10 + $0x44] sm:$0xf]
    %v393 = vld [vmem:[#allocation10 + $0x48] sm:$0xf]
    %v394 = vld [vmem:[#allocation10 + $0x4c] sm:$0xf]
    %v395 = vld [vmem:[#allocation10 + $0x50] sm:$0xf]
    %v396 = vld [vmem:[#allocation10 + $0x54] sm:$0xf]
    %v397 = vld [vmem:[#allocation10 + $0x58] sm:$0xf]
    %v398 = vld [vmem:[#allocation10 + $0x5c] sm:$0xf]
    %v399 = vld [vmem:[#allocation10 + $0x60] sm:$0xf]
    %v400 = vld [vmem:[#allocation10 + $0x64] sm:$0xf]
    %v401 = vld [vmem:[#allocation10 + $0x68] sm:$0xf]
    %v402 = vld [vmem:[#allocation10 + $0x6c] sm:$0xf]
    %v403 = vld [vmem:[#allocation10 + $0x70] sm:$0xf]
    %v404 = vld [vmem:[#allocation10 + $0x74] sm:$0xf]
    %v405 = vld [vmem:[#allocation10 + $0x78] sm:$0xf]
    %v406 = vld [vmem:[#allocation10 + $0x7c] sm:$0xf]
    %v407 = vld [vmem:[#allocation10 + $0x80] sm:$0xf]
    %v408 = vld [vmem:[#allocation10 + $0x84] sm:$0xf]
    %v409 = vld [vmem:[#allocation10 + $0x88] sm:$0xf]
    %v410 = vld [vmem:[#allocation10 + $0x8c] sm:$0xf]
    %v411 = vld [vmem:[#allocation10 + $0x90] sm:$0xf]
    %v412 = vld [vmem:[#allocation10 + $0x94] sm:$0xf]
    %v413 = vld [vmem:[#allocation10 + $0x98] sm:$0xf]
    %v414 = vld [vmem:[#allocation10 + $0x9c] sm:$0xf]
    %v415 = vld [vmem:[#allocation10 + $0xa0] sm:$0xf]
    %v416 = vld [vmem:[#allocation10 + $0xa4] sm:$0xf]
    %v417 = vld [vmem:[#allocation10 + $0xa8] sm:$0xf]
    %v418 = vld [vmem:[#allocation10 + $0xac] sm:$0xf]
    %v419 = vld [vmem:[#allocation10 + $0xb0] sm:$0xf]
    %v420 = vld [vmem:[#allocation10 + $0xb4] sm:$0xf]
    %v421 = vld [vmem:[#allocation10 + $0xb8] sm:$0xf]
    %v422 = vld [vmem:[#allocation10 + $0xbc] sm:$0xf]
    %v423 = vld [vmem:[#allocation10 + $0xc0] sm:$0xf]
    %v424 = vld [vmem:[#allocation10 + $0xc4] sm:$0xf]
    %v425 = vld [vmem:[#allocation10 + $0xc8] sm:$0xf]
    %v426 = vld [vmem:[#allocation10 + $0xcc] sm:$0xf]
    %v427 = vld [vmem:[#allocation10 + $0xd0] sm:$0xf]
    %v428 = vld [vmem:[#allocation10 + $0xd4] sm:$0xf]
    %v429 = vld [vmem:[#allocation10 + $0xd8] sm:$0xf]
    %v430 = vld [vmem:[#allocation10 + $0xdc] sm:$0xf]
    %v431 = vld [vmem:[#allocation10 + $0xe0] sm:$0xf]
    %v432 = vld [vmem:[#allocation10 + $0xe4] sm:$0xf]
    %v433 = vld [vmem:[#allocation10 + $0xe8] sm:$0xf]
    %v434 = vld [vmem:[#allocation10 + $0xec] sm:$0xf]
    %v435 = vld [vmem:[#allocation10 + $0xf0] sm:$0xf]
    %v436 = vld [vmem:[#allocation10 + $0xf4] sm:$0xf]
    %v437 = vld [vmem:[#allocation10 + $0xf8] sm:$0xf]
    %v438 = vld [vmem:[#allocation10 + $0xfc] sm:$0xf]
    %v439 = vld [vmem:[#allocation10 + $0x100] sm:$0xf]
    %v440 = vld [vmem:[#allocation10 + $0x104] sm:$0xf]
    %v441 = vld [vmem:[#allocation10 + $0x108] sm:$0xf]
    %v442 = vld [vmem:[#allocation10 + $0x10c] sm:$0xf]
    %v443 = vld [vmem:[#allocation10 + $0x110] sm:$0xf]
    %v444 = vld [vmem:[#allocation10 + $0x114] sm:$0xf]
    %v445 = vld [vmem:[#allocation10 + $0x118] sm:$0xf]
    %v446 = vld [vmem:[#allocation10 + $0x11c] sm:$0xf]
    %v447 = vld [vmem:[#allocation10 + $0x120] sm:$0xf]
    %v448 = vld [vmem:[#allocation10 + $0x124] sm:$0xf]
    %v449 = vld [vmem:[#allocation10 + $0x128] sm:$0xf]
    %v450 = vld [vmem:[#allocation10 + $0x12c] sm:$0xf]
    %v451 = vld [vmem:[#allocation10 + $0x130] sm:$0xf]
    %v452 = vld [vmem:[#allocation10 + $0x134] sm:$0xf]
    %v453 = vld [vmem:[#allocation10 + $0x138] sm:$0xf]
    %v454 = vld [vmem:[#allocation10 + $0x13c] sm:$0xf]
    %v455 = vld [vmem:[#allocation10 + $0x140] sm:$0xf]
    %v456 = vld [vmem:[#allocation10 + $0x144] sm:$0xf]
    %v457 = vld [vmem:[#allocation10 + $0x148] sm:$0xf]
    %v458 = vld [vmem:[#allocation10 + $0x14c] sm:$0xf]
    %v459 = vld [vmem:[#allocation10 + $0x150] sm:$0xf]
    %v460 = vld [vmem:[#allocation10 + $0x154] sm:$0xf]
    %v461 = vld [vmem:[#allocation10 + $0x158] sm:$0xf]
    %v462 = vld [vmem:[#allocation10 + $0x15c] sm:$0xf]
    %v463 = vld [vmem:[#allocation10 + $0x160] sm:$0xf]
    %v464 = vld [vmem:[#allocation10 + $0x164] sm:$0xf]
    %v465 = vld [vmem:[#allocation10 + $0x168] sm:$0xf]
    %v466 = vld [vmem:[#allocation10 + $0x16c] sm:$0xf]
    %v467 = vld [vmem:[#allocation10 + $0x170] sm:$0xf]
    %v468 = vld [vmem:[#allocation10 + $0x174] sm:$0xf]
    %v469 = vld [vmem:[#allocation10 + $0x178] sm:$0xf]
    %v470 = vld [vmem:[#allocation10 + $0x17c] sm:$0xf]
    %v471 = vld [vmem:[#allocation10 + $0x180] sm:$0xf]
    %v472 = vld [vmem:[#allocation10 + $0x184] sm:$0xf]
    %v473 = vld [vmem:[#allocation10 + $0x188] sm:$0xf]
    %v474 = vld [vmem:[#allocation10 + $0x18c] sm:$0xf]
    %v475 = vld [vmem:[#allocation10 + $0x190] sm:$0xf]
    %v476 = vld [vmem:[#allocation10 + $0x194] sm:$0xf]
    %v477 = vld [vmem:[#allocation10 + $0x198] sm:$0xf]
    %v478 = vld [vmem:[#allocation10 + $0x19c] sm:$0xf]
    %v479 = vld [vmem:[#allocation10 + $0x1a0] sm:$0xf]
    %v480 = vld [vmem:[#allocation10 + $0x1a4] sm:$0xf]
    %v481 = vld [vmem:[#allocation10 + $0x1a8] sm:$0xf]
    %v482 = vld [vmem:[#allocation10 + $0x1ac] sm:$0xf]
    %v483 = vld [vmem:[#allocation10 + $0x1b0] sm:$0xf]
    %v484 = vld [vmem:[#allocation10 + $0x1b4] sm:$0xf]
    %v485 = vld [vmem:[#allocation10 + $0x1b8] sm:$0xf]
    %v486 = vld [vmem:[#allocation10 + $0x1bc] sm:$0xf]
    %v487 = vld [vmem:[#allocation10 + $0x1c0] sm:$0xf]
    %v488 = vld [vmem:[#allocation10 + $0x1c4] sm:$0xf]
    %v489 = vld [vmem:[#allocation10 + $0x1c8] sm:$0xf]
    %v490 = vld [vmem:[#allocation10 + $0x1cc] sm:$0xf]
    %v491 = vld [vmem:[#allocation10 + $0x1d0] sm:$0xf]
    %v492 = vld [vmem:[#allocation10 + $0x1d4] sm:$0xf]
    %v493 = vld [vmem:[#allocation10 + $0x1d8] sm:$0xf]
    %v494 = vld [vmem:[#allocation10 + $0x1dc] sm:$0xf]
    %v495 = vld [vmem:[#allocation10 + $0x1e0] sm:$0xf]
    %v496 = vld [vmem:[#allocation10 + $0x1e4] sm:$0xf]
    %v497 = vld [vmem:[#allocation10 + $0x1e8] sm:$0xf]
    %v498 = vld [vmem:[#allocation10 + $0x1ec] sm:$0xf]
    %v499 = vld [vmem:[#allocation10 + $0x1f0] sm:$0xf]
    %v500 = vld [vmem:[#allocation10 + $0x1f4] sm:$0xf]
    %v501 = vld [vmem:[#allocation10 + $0x1f8] sm:$0xf]
    %v502 = vld [vmem:[#allocation10 + $0x1fc] sm:$0xf]
    %v503 = vld [vmem:[%s5] sm:$0x1]
    %v505 = vlaneseq
    %v506 = vshrl.u32 %v505, 7
    %v507 = vsub.s32 0, %v506
    %v508 = vrot.slane %v503, %v507
    %v638 = vunpack.c.l.b16 %v375
    %v639 = vunpack.c.l.b16 %v376
    %v640 = vunpack.c.l.b16 %v377
    %v641 = vunpack.c.l.b16 %v378
    %v642 = vunpack.c.l.b16 %v379
    %v643 = vunpack.c.l.b16 %v380
    %v644 = vunpack.c.l.b16 %v381
    %v645 = vunpack.c.l.b16 %v382
    %v646 = vunpack.c.l.b16 %v383
    %v647 = vunpack.c.l.b16 %v384
    %v648 = vunpack.c.l.b16 %v385
    %v649 = vunpack.c.l.b16 %v386
    %v650 = vunpack.c.l.b16 %v387
    %v651 = vunpack.c.l.b16 %v388
    %v652 = vunpack.c.l.b16 %v389
    %v653 = vunpack.c.l.b16 %v390
    %v654 = vunpack.c.l.b16 %v391
    %v655 = vunpack.c.l.b16 %v392
    %v656 = vunpack.c.l.b16 %v393
    %v657 = vunpack.c.l.b16 %v394
    %v658 = vunpack.c.l.b16 %v395
    %v659 = vunpack.c.l.b16 %v396
    %v660 = vunpack.c.l.b16 %v397
    %v661 = vunpack.c.l.b16 %v398
    %v662 = vunpack.c.l.b16 %v399
    %v663 = vunpack.c.l.b16 %v400
    %v664 = vunpack.c.l.b16 %v401
    %v665 = vunpack.c.l.b16 %v402
    %v666 = vunpack.c.l.b16 %v403
    %v667 = vunpack.c.l.b16 %v404
    %v668 = vunpack.c.l.b16 %v405
    %v669 = vunpack.c.l.b16 %v406
    %v670 = vunpack.c.l.b16 %v407
    %v671 = vunpack.c.l.b16 %v408
    %v672 = vunpack.c.l.b16 %v409
    %v673 = vunpack.c.l.b16 %v410
    %v674 = vunpack.c.l.b16 %v411
    %v675 = vunpack.c.l.b16 %v412
    %v676 = vunpack.c.l.b16 %v413
    %v677 = vunpack.c.l.b16 %v414
    %v678 = vunpack.c.l.b16 %v415
    %v679 = vunpack.c.l.b16 %v416
    %v680 = vunpack.c.l.b16 %v417
    %v681 = vunpack.c.l.b16 %v418
    %v682 = vunpack.c.l.b16 %v419
    %v683 = vunpack.c.l.b16 %v420
    %v684 = vunpack.c.l.b16 %v421
    %v685 = vunpack.c.l.b16 %v422
    %v686 = vunpack.c.l.b16 %v423
    %v687 = vunpack.c.l.b16 %v424
    %v688 = vunpack.c.l.b16 %v425
    %v689 = vunpack.c.l.b16 %v426
    %v690 = vunpack.c.l.b16 %v427
    %v691 = vunpack.c.l.b16 %v428
    %v692 = vunpack.c.l.b16 %v429
    %v693 = vunpack.c.l.b16 %v430
    %v694 = vunpack.c.l.b16 %v431
    %v695 = vunpack.c.l.b16 %v432
    %v696 = vunpack.c.l.b16 %v433
    %v697 = vunpack.c.l.b16 %v434
    %v698 = vunpack.c.l.b16 %v435
    %v699 = vunpack.c.l.b16 %v436
    %v700 = vunpack.c.l.b16 %v437
    %v701 = vunpack.c.l.b16 %v438
    %v702 = vunpack.c.l.b16 %v439
    %v703 = vunpack.c.l.b16 %v440
    %v704 = vunpack.c.l.b16 %v441
    %v705 = vunpack.c.l.b16 %v442
    %v706 = vunpack.c.l.b16 %v443
    %v707 = vunpack.c.l.b16 %v444
    %v708 = vunpack.c.l.b16 %v445
    %v709 = vunpack.c.l.b16 %v446
    %v710 = vunpack.c.l.b16 %v447
    %v711 = vunpack.c.l.b16 %v448
    %v712 = vunpack.c.l.b16 %v449
    %v713 = vunpack.c.l.b16 %v450
    %v714 = vunpack.c.l.b16 %v451
    %v715 = vunpack.c.l.b16 %v452
    %v716 = vunpack.c.l.b16 %v453
    %v717 = vunpack.c.l.b16 %v454
    %v718 = vunpack.c.l.b16 %v455
    %v719 = vunpack.c.l.b16 %v456
    %v720 = vunpack.c.l.b16 %v457
    %v721 = vunpack.c.l.b16 %v458
    %v722 = vunpack.c.l.b16 %v459
    %v723 = vunpack.c.l.b16 %v460
    %v724 = vunpack.c.l.b16 %v461
    %v725 = vunpack.c.l.b16 %v462
    %v726 = vunpack.c.l.b16 %v463
    %v727 = vunpack.c.l.b16 %v464
    %v728 = vunpack.c.l.b16 %v465
    %v729 = vunpack.c.l.b16 %v466
    %v730 = vunpack.c.l.b16 %v467
    %v731 = vunpack.c.l.b16 %v468
    %v732 = vunpack.c.l.b16 %v469
    %v733 = vunpack.c.l.b16 %v470
    %v734 = vunpack.c.l.b16 %v471
    %v735 = vunpack.c.l.b16 %v472
    %v736 = vunpack.c.l.b16 %v473
    %v737 = vunpack.c.l.b16 %v474
    %v738 = vunpack.c.l.b16 %v475
    %v739 = vunpack.c.l.b16 %v476
    %v740 = vunpack.c.l.b16 %v477
    %v741 = vunpack.c.l.b16 %v478
    %v742 = vunpack.c.l.b16 %v479
    %v743 = vunpack.c.l.b16 %v480
    %v744 = vunpack.c.l.b16 %v481
    %v745 = vunpack.c.l.b16 %v482
    %v746 = vunpack.c.l.b16 %v483
    %v747 = vunpack.c.l.b16 %v484
    %v748 = vunpack.c.l.b16 %v485
    %v749 = vunpack.c.l.b16 %v486
    %v750 = vunpack.c.l.b16 %v487
    %v751 = vunpack.c.l.b16 %v488
    %v752 = vunpack.c.l.b16 %v489
    %v753 = vunpack.c.l.b16 %v490
    %v754 = vunpack.c.l.b16 %v491
    %v755 = vunpack.c.l.b16 %v492
    %v756 = vunpack.c.l.b16 %v493
    %v757 = vunpack.c.l.b16 %v494
    %v758 = vunpack.c.l.b16 %v495
    %v759 = vunpack.c.l.b16 %v496
    %v760 = vunpack.c.l.b16 %v497
    %v761 = vunpack.c.l.b16 %v498
    %v762 = vunpack.c.l.b16 %v499
    %v763 = vunpack.c.l.b16 %v500
    %v764 = vunpack.c.l.b16 %v501
    %v765 = vunpack.c.l.b16 %v502
    %v766 = vpack.c.b16 %v639, %v638
    %v767 = vpack.c.b16 %v641, %v640
    %v768 = vpack.c.b16 %v643, %v642
    %v769 = vpack.c.b16 %v645, %v644
    %v770 = vpack.c.b16 %v647, %v646
    %v771 = vpack.c.b16 %v649, %v648
    %v772 = vpack.c.b16 %v651, %v650
    %v773 = vpack.c.b16 %v653, %v652
    %v774 = vpack.c.b16 %v655, %v654
    %v775 = vpack.c.b16 %v657, %v656
    %v776 = vpack.c.b16 %v659, %v658
    %v777 = vpack.c.b16 %v661, %v660
    %v778 = vpack.c.b16 %v663, %v662
    %v779 = vpack.c.b16 %v665, %v664
    %v780 = vpack.c.b16 %v667, %v666
    %v781 = vpack.c.b16 %v669, %v668
    %v782 = vpack.c.b16 %v671, %v670
    %v783 = vpack.c.b16 %v673, %v672
    %v784 = vpack.c.b16 %v675, %v674
    %v785 = vpack.c.b16 %v677, %v676
    %v786 = vpack.c.b16 %v679, %v678
    %v787 = vpack.c.b16 %v681, %v680
    %v788 = vpack.c.b16 %v683, %v682
    %v789 = vpack.c.b16 %v685, %v684
    %v790 = vpack.c.b16 %v687, %v686
    %v791 = vpack.c.b16 %v689, %v688
    %v792 = vpack.c.b16 %v691, %v690
    %v793 = vpack.c.b16 %v693, %v692
    %v794 = vpack.c.b16 %v695, %v694
    %v795 = vpack.c.b16 %v697, %v696
    %v796 = vpack.c.b16 %v699, %v698
    %v797 = vpack.c.b16 %v701, %v700
    %v798 = vpack.c.b16 %v703, %v702
    %v799 = vpack.c.b16 %v705, %v704
    %v800 = vpack.c.b16 %v707, %v706
    %v801 = vpack.c.b16 %v709, %v708
    %v802 = vpack.c.b16 %v711, %v710
    %v803 = vpack.c.b16 %v713, %v712
    %v804 = vpack.c.b16 %v715, %v714
    %v805 = vpack.c.b16 %v717, %v716
    %v806 = vpack.c.b16 %v719, %v718
    %v807 = vpack.c.b16 %v721, %v720
    %v808 = vpack.c.b16 %v723, %v722
    %v809 = vpack.c.b16 %v725, %v724
    %v810 = vpack.c.b16 %v727, %v726
    %v811 = vpack.c.b16 %v729, %v728
    %v812 = vpack.c.b16 %v731, %v730
    %v813 = vpack.c.b16 %v733, %v732
    %v814 = vpack.c.b16 %v735, %v734
    %v815 = vpack.c.b16 %v737, %v736
    %v816 = vpack.c.b16 %v739, %v738
    %v817 = vpack.c.b16 %v741, %v740
    %v818 = vpack.c.b16 %v743, %v742
    %v819 = vpack.c.b16 %v745, %v744
    %v820 = vpack.c.b16 %v747, %v746
    %v821 = vpack.c.b16 %v749, %v748
    %v822 = vpack.c.b16 %v751, %v750
    %v823 = vpack.c.b16 %v753, %v752
    %v824 = vpack.c.b16 %v755, %v754
    %v825 = vpack.c.b16 %v757, %v756
    %v826 = vpack.c.b16 %v759, %v758
    %v827 = vpack.c.b16 %v761, %v760
    %v828 = vpack.c.b16 %v763, %v762
    %v829 = vpack.c.b16 %v765, %v764
    %894 = vmatprep.subr.bf16.mxu0 0
    %895 = vmatpush1.bf16.msra.mxu0 %v773
    %896 = vmatprep.subr.bf16.mxu0 0
    %897 = vmatpush1.bf16.msra.mxu0 %v772
    %898 = vmatprep.subr.bf16.mxu0 0
    %899 = vmatpush1.bf16.msra.mxu0 %v771
    %900 = vmatprep.subr.bf16.mxu0 0
    %901 = vmatpush1.bf16.msra.mxu0 %v770
    %902 = vmatprep.subr.bf16.mxu0 0
    %903 = vmatpush1.bf16.msra.mxu0 %v769
    %904 = vmatprep.subr.bf16.mxu0 0
    %905 = vmatpush1.bf16.msra.mxu0 %v768
    %906 = vmatprep.subr.bf16.mxu0 0
    %907 = vmatpush1.bf16.msra.mxu0 %v767
    %908 = vmatprep.subr.bf16.mxu0 0
    %909 = vmatpush1.bf16.msra.mxu0 %v766
    %910 = vmatprep.subr.bf16.mxu0 0
    %911 = vmatpush2.bf16.msra.mxu0 %v781
    %912 = vmatprep.subr.bf16.mxu0 0
    %913 = vmatpush2.bf16.msra.mxu0 %v780
    %914 = vmatprep.subr.bf16.mxu0 0
    %915 = vmatpush2.bf16.msra.mxu0 %v779
    %916 = vmatprep.subr.bf16.mxu0 0
    %917 = vmatpush2.bf16.msra.mxu0 %v778
    %918 = vmatprep.subr.bf16.mxu0 0
    %919 = vmatpush2.bf16.msra.mxu0 %v777
    %920 = vmatprep.subr.bf16.mxu0 0
    %921 = vmatpush2.bf16.msra.mxu0 %v776
    %922 = vmatprep.subr.bf16.mxu0 0
    %923 = vmatpush2.bf16.msra.mxu0 %v775
    %924 = vmatprep.subr.bf16.mxu0 0
    %925 = vmatpush2.bf16.msra.mxu0 %v774
    %926 = vmatprep.mubr.bf16.mxu0 %v368
    %927 = vmatmul.mubr.bf16.gmra.mxu0 %v367
    %v928 = vpop.f32.mrf.mxu0
    %v929 = vadd.f32 %v508, %v928
    %v930 = vpop.f32.mrf.mxu0
    %v931 = vpop.f32.mrf.mxu0
    %v932 = vadd.f32 %v508, %v931
    %v933 = vpop.f32.mrf.mxu0
    %934 = vdwg.mxu0
    %935 = vmatprep.subr.bf16.mxu0 0
    %936 = vmatpush1.bf16.msra.mxu0 %v789
    %937 = vmatprep.subr.bf16.mxu0 0
    %938 = vmatpush1.bf16.msra.mxu0 %v788
    %939 = vmatprep.subr.bf16.mxu0 0
    %940 = vmatpush1.bf16.msra.mxu0 %v787
    %941 = vmatprep.subr.bf16.mxu0 0
    %942 = vmatpush1.bf16.msra.mxu0 %v786
    %943 = vmatprep.subr.bf16.mxu0 0
    %944 = vmatpush1.bf16.msra.mxu0 %v785
    %945 = vmatprep.subr.bf16.mxu0 0
    %946 = vmatpush1.bf16.msra.mxu0 %v784
    %947 = vmatprep.subr.bf16.mxu0 0
    %948 = vmatpush1.bf16.msra.mxu0 %v783
    %949 = vmatprep.subr.bf16.mxu0 0
    %950 = vmatpush1.bf16.msra.mxu0 %v782
    %951 = vmatprep.subr.bf16.mxu0 0
    %952 = vmatpush2.bf16.msra.mxu0 %v797
    %953 = vmatprep.subr.bf16.mxu0 0
    %954 = vmatpush2.bf16.msra.mxu0 %v796
    %955 = vmatprep.subr.bf16.mxu0 0
    %956 = vmatpush2.bf16.msra.mxu0 %v795
    %957 = vmatprep.subr.bf16.mxu0 0
    %958 = vmatpush2.bf16.msra.mxu0 %v794
    %959 = vmatprep.subr.bf16.mxu0 0
    %960 = vmatpush2.bf16.msra.mxu0 %v793
    %961 = vmatprep.subr.bf16.mxu0 0
    %962 = vmatpush2.bf16.msra.mxu0 %v792
    %963 = vmatprep.subr.bf16.mxu0 0
    %964 = vmatpush2.bf16.msra.mxu0 %v791
    %965 = vmatprep.subr.bf16.mxu0 0
    %966 = vmatpush2.bf16.msra.mxu0 %v790
    %967 = vmatprep.mubr.bf16.mxu0 %v370
    %968 = vmatmul.mubr.bf16.gmra.mxu0 %v369
    %v969 = vpop.f32.mrf.mxu0
    %v970 = vadd.f32 %v929, %v969
    %v971 = vpop.f32.mrf.mxu0
    %v972 = vpop.f32.mrf.mxu0
    %v973 = vadd.f32 %v932, %v972
    %v974 = vpop.f32.mrf.mxu0
    %975 = vdwg.mxu0
    %976 = vmatprep.subr.bf16.mxu0 0
    %977 = vmatpush1.bf16.msra.mxu0 %v805
    %978 = vmatprep.subr.bf16.mxu0 0
    %979 = vmatpush1.bf16.msra.mxu0 %v804
    %980 = vmatprep.subr.bf16.mxu0 0
    %981 = vmatpush1.bf16.msra.mxu0 %v803
    %982 = vmatprep.subr.bf16.mxu0 0
    %983 = vmatpush1.bf16.msra.mxu0 %v802
    %984 = vmatprep.subr.bf16.mxu0 0
    %985 = vmatpush1.bf16.msra.mxu0 %v801
    %986 = vmatprep.subr.bf16.mxu0 0
    %987 = vmatpush1.bf16.msra.mxu0 %v800
    %988 = vmatprep.subr.bf16.mxu0 0
    %989 = vmatpush1.bf16.msra.mxu0 %v799
    %990 = vmatprep.subr.bf16.mxu0 0
    %991 = vmatpush1.bf16.msra.mxu0 %v798
    %992 = vmatprep.subr.bf16.mxu0 0
    %993 = vmatpush2.bf16.msra.mxu0 %v813
    %994 = vmatprep.subr.bf16.mxu0 0
    %995 = vmatpush2.bf16.msra.mxu0 %v812
    %996 = vmatprep.subr.bf16.mxu0 0
    %997 = vmatpush2.bf16.msra.mxu0 %v811
    %998 = vmatprep.subr.bf16.mxu0 0
    %999 = vmatpush2.bf16.msra.mxu0 %v810
    %1000 = vmatprep.subr.bf16.mxu0 0
    %1001 = vmatpush2.bf16.msra.mxu0 %v809
    %1002 = vmatprep.subr.bf16.mxu0 0
    %1003 = vmatpush2.bf16.msra.mxu0 %v808
    %1004 = vmatprep.subr.bf16.mxu0 0
    %1005 = vmatpush2.bf16.msra.mxu0 %v807
    %1006 = vmatprep.subr.bf16.mxu0 0
    %1007 = vmatpush2.bf16.msra.mxu0 %v806
    %1008 = vmatprep.mubr.bf16.mxu0 %v372
    %1009 = vmatmul.mubr.bf16.gmra.mxu0 %v371
    %v1010 = vpop.f32.mrf.mxu0
    %v1011 = vadd.f32 %v970, %v1010
    %v1012 = vpop.f32.mrf.mxu0
    %v1013 = vpop.f32.mrf.mxu0
    %v1014 = vadd.f32 %v973, %v1013
    %v1015 = vpop.f32.mrf.mxu0
    %1016 = vdwg.mxu0
    %1017 = vmatprep.subr.bf16.mxu0 0
    %1018 = vmatpush1.bf16.msra.mxu0 %v821
    %1019 = vmatprep.subr.bf16.mxu0 0
    %1020 = vmatpush1.bf16.msra.mxu0 %v820
    %1021 = vmatprep.subr.bf16.mxu0 0
    %1022 = vmatpush1.bf16.msra.mxu0 %v819
    %1023 = vmatprep.subr.bf16.mxu0 0
    %1024 = vmatpush1.bf16.msra.mxu0 %v818
    %1025 = vmatprep.subr.bf16.mxu0 0
    %1026 = vmatpush1.bf16.msra.mxu0 %v817
    %1027 = vmatprep.subr.bf16.mxu0 0
    %1028 = vmatpush1.bf16.msra.mxu0 %v816
    %1029 = vmatprep.subr.bf16.mxu0 0
    %1030 = vmatpush1.bf16.msra.mxu0 %v815
    %1031 = vmatprep.subr.bf16.mxu0 0
    %1032 = vmatpush1.bf16.msra.mxu0 %v814
    %1033 = vmatprep.subr.bf16.mxu0 0
    %1034 = vmatpush2.bf16.msra.mxu0 %v829
    %1035 = vmatprep.subr.bf16.mxu0 0
    %1036 = vmatpush2.bf16.msra.mxu0 %v828
    %1037 = vmatprep.subr.bf16.mxu0 0
    %1038 = vmatpush2.bf16.msra.mxu0 %v827
    %1039 = vmatprep.subr.bf16.mxu0 0
    %1040 = vmatpush2.bf16.msra.mxu0 %v826
    %1041 = vmatprep.subr.bf16.mxu0 0
    %1042 = vmatpush2.bf16.msra.mxu0 %v825
    %1043 = vmatprep.subr.bf16.mxu0 0
    %1044 = vmatpush2.bf16.msra.mxu0 %v824
    %1045 = vmatprep.subr.bf16.mxu0 0
    %1046 = vmatpush2.bf16.msra.mxu0 %v823
    %1047 = vmatprep.subr.bf16.mxu0 0
    %1048 = vmatpush2.bf16.msra.mxu0 %v822
    %1049 = vmatprep.mubr.bf16.mxu0 %v374
    %1050 = vmatmul.mubr.bf16.gmra.mxu0 %v373
    %v1051 = vpop.f32.mrf.mxu0
    %v1052 = vadd.f32 %v1011, %v1051
    %v1053 = vpop.f32.mrf.mxu0
    %v1054 = vpop.f32.mrf.mxu0
    %v1055 = vadd.f32 %v1014, %v1054
    %v1056 = vpop.f32.mrf.mxu0
    %1057 = vdwg.mxu0
    %v1058 = vlaneseq
    %v1059 = vand.u32 %v1058, 127
    %1060 = vmax.xlane.f32.xlu0 %v1052
    %v1061 = vpop.xlane.xlu0 %1060
    %1062 = vmax.xlane.f32.xlu0 %v1055
    %v1063 = vpop.xlane.xlu0 %1062
    %vm1064 = vcmp.eq.f32.partialorder %v1052, %v1061
    %vm1065 = vcmp.eq.f32.partialorder %v1055, %v1063
    %v1066 = vsel %vm1064, %v1059, 128
    %v1067 = vsel %vm1065, %v1059, 128
    %v1068 = vand.u32 %v1066, 65535
    %v1069 = vshra.s32 %v1066, 16
    %v1070 = vcvt.s32.f32 %v1068
    %v1071 = vcvt.s32.f32 %v1069
    %1072 = vmin.xlane.f32.xlu0 %v1071
    %v1073 = vpop.xlane.xlu0 %1072
    %vm1074 = vcmp.eq.f32.partialorder %v1071, %v1073
    %v1075 = vsel %vm1074, %v1070, inf
    %1076 = vmin.xlane.f32.xlu0 %v1075
    %v1077 = vpop.xlane.xlu0 %1076
    %v1078 = vcvt.f32.s32 %v1077
    %v1079 = vcvt.f32.s32 %v1073
    %v1080 = vshll.u32 %v1079, 16
    %v1081 = vadd.s32 %v1080, %v1078
    %v1082 = vand.u32 %v1067, 65535
    %v1083 = vshra.s32 %v1067, 16
    %v1084 = vcvt.s32.f32 %v1082
    %v1085 = vcvt.s32.f32 %v1083
    %1086 = vmin.xlane.f32.xlu0 %v1085
    %v1087 = vpop.xlane.xlu0 %1086
    %vm1088 = vcmp.eq.f32.partialorder %v1085, %v1087
    %v1089 = vsel %vm1088, %v1084, inf
    %1090 = vmin.xlane.f32.xlu0 %v1089
    %v1091 = vpop.xlane.xlu0 %1090
    %v1092 = vcvt.f32.s32 %v1091
    %v1093 = vcvt.f32.s32 %v1087
    %v1094 = vshll.u32 %v1093, 16
    %v1095 = vadd.s32 %v1094, %v1092
    %vm1096 = vcmp.eq.s32.totalorder %v1059, %v1081
    %vm1097 = vcmp.eq.s32.totalorder %v1059, %v1095
    %v1098 = vsel %vm1096, 1, 0
    %v1099 = vsel %vm1097, 1, 0
    %v1100 = vcvt.s32.f32 %v1098
    %v1101 = vcvt.s32.f32 %v1099
    %v1102 = vld [vmem:[%s6] sm:$0x3]
    %v1104 = vsel %vm151, %v1102, 0
    %1106 = vmatprep.subr.mxu0 0.0
    %1107 = vmatpush1.msra.mxu0 0.0
    %1108 = vmatprep.subr.mxu0 0.0
    %1109 = vmatpush1.msra.mxu0 0.0
    %1110 = vmatprep.subr.mxu0 0.0
    %1111 = vmatpush1.msra.mxu0 0.0
    %1112 = vmatprep.subr.mxu0 0.0
    %1113 = vmatpush1.msra.mxu0 0.0
    %1114 = vmatprep.subr.mxu0 0.0
    %1115 = vmatpush1.msra.mxu0 0.0
    %1116 = vmatprep.subr.mxu0 0.0
    %1117 = vmatpush1.msra.mxu0 0.0
    %1118 = vmatprep.subr.mxu0 0.0
    %1119 = vmatpush1.msra.mxu0 0.0
    %1120 = vmatprep.subr.mxu0 0.0
    %1121 = vmatpush1.msra.mxu0 0.0
    %1122 = vmatprep.subr.mxu0 0.0
    %1123 = vmatpush1.msra.mxu0 0.0
    %1124 = vmatprep.subr.mxu0 0.0
    %1125 = vmatpush1.msra.mxu0 0.0
    %1126 = vmatprep.subr.mxu0 0.0
    %1127 = vmatpush1.msra.mxu0 0.0
    %1128 = vmatprep.subr.mxu0 0.0
    %1129 = vmatpush1.msra.mxu0 0.0
    %1130 = vmatprep.subr.mxu0 0.0
    %1131 = vmatpush1.msra.mxu0 0.0
    %1132 = vmatprep.subr.mxu0 0.0
    %1133 = vmatpush1.msra.mxu0 0.0
    %1134 = vmatprep.subr.mxu0 0.0
    %1135 = vmatpush1.msra.mxu0 %v1101
    %1136 = vmatprep.subr.mxu0 0.0
    %1137 = vmatpush1.msra.mxu0 %v1100
    %1138 = vmatprep.subr.mxu0 0.0
    %1139 = vmatpush2.msra.mxu0 0.0
    %1140 = vmatprep.subr.mxu0 0.0
    %1141 = vmatpush2.msra.mxu0 0.0
    %1142 = vmatprep.subr.mxu0 0.0
    %1143 = vmatpush2.msra.mxu0 0.0
    %1144 = vmatprep.subr.mxu0 0.0
    %1145 = vmatpush2.msra.mxu0 0.0
    %1146 = vmatprep.subr.mxu0 0.0
    %1147 = vmatpush2.msra.mxu0 0.0
    %1148 = vmatprep.subr.mxu0 0.0
    %1149 = vmatpush2.msra.mxu0 0.0
    %1150 = vmatprep.subr.mxu0 0.0
    %1151 = vmatpush2.msra.mxu0 0.0
    %1152 = vmatprep.subr.mxu0 0.0
    %1153 = vmatpush2.msra.mxu0 0.0
    %1154 = vmatprep.subr.mxu0 0.0
    %1155 = vmatpush2.msra.mxu0 0.0
    %1156 = vmatprep.subr.mxu0 0.0
    %1157 = vmatpush2.msra.mxu0 0.0
    %1158 = vmatprep.subr.mxu0 0.0
    %1159 = vmatpush2.msra.mxu0 0.0
    %1160 = vmatprep.subr.mxu0 0.0
    %1161 = vmatpush2.msra.mxu0 0.0
    %1162 = vmatprep.subr.mxu0 0.0
    %1163 = vmatpush2.msra.mxu0 0.0
    %1164 = vmatprep.subr.mxu0 0.0
    %1165 = vmatpush2.msra.mxu0 0.0
    %1166 = vmatprep.subr.mxu0 0.0
    %1167 = vmatpush2.msra.mxu0 0.0
    %1168 = vmatprep.subr.mxu0 0.0
    %1169 = vmatpush2.msra.mxu0 0.0
    %1170 = vmatprep.mubr.f32.mxu0 0.0
    %1171 = vmatmul.mubr.f32.gmra.mxu0 %v1104
    %v1172 = vpop.f32.mrf.mxu0
    %v1173 = vadd.f32 0.0, %v1172
    %v1174 = vpop.f32.mrf.mxu0
    %1175 = vdwg.mxu0
    %1176 = vst [vmem:[#allocation11] sm:$0x3] %v1173
    // Predicated region
    $region50: #{tpu_custom_call.1} parent=1 // pred_check
      _
    $region51: #{tpu_custom_call.1} parent=1 // pred_check_branch
      %1178 = sbr.rel (0) target = $region53
    $region52: #{tpu_custom_call.1} parent=1 // pred_region
      %s1180 = ssub.s32 32, 32
      %1181 = vsyncadd [#allocation4], %s1180
      %s1183 = sshll.u32 [#allocation11], 4
      %s1184 = int_to_ptr.vmem [resolvable:$true] %s1183
      %1186 = dma.vmem_to_hbm [thread:$0]  %s1184, 32, %s7, [#allocation4]
    $region53: #{tpu_custom_call.1} parent=1 // pred_fallthru
      _
    // Predicated region
    $region54: #{tpu_custom_call.1} parent=1 // pred_check
      _
    $region55: #{tpu_custom_call.1} parent=1 // pred_check_branch
      %1188 = sbr.rel (0) target = $region57
    $region56: #{tpu_custom_call.1} parent=1 // pred_region
      %1189 = dma.done [#allocation4], 32
    $region57: #{tpu_custom_call.1} parent=1 // pred_fallthru
      _
    %1190 = vsyncpa [#allocation3], 1
    %1191 = vsyncpa [#allocation6], 1
    %1192 = vsyncpa [#allocation9], 1
    %1193 = vsyncpa [#allocation4], 1

</llo_original>
